<compile_context>
chip_gen: v6e
topology: v6e:2x2x1
jax: 0.10.0
libtpu: 0.0.40
codegen_flags: <defaults>
</compile_context>

<pallas_src>
import jax
import jax.numpy as jnp
import numpy as np
from jax.experimental import pallas as pl
from jax.experimental.pallas import tpu as pltpu


def _round_up(x, m):
    return (x + m - 1) // m * m


def _vmem_limit_bytes():
    """Generation-aware VMEM limit (64 MiB on v7x, 128 MiB on v5e/v6e physical)."""
    try:
        cap = int(pltpu.get_tpu_info().vmem_capacity_bytes)
    except Exception:
        cap = 64 * 1024 * 1024
    return int(min(cap * 3 // 4, 100 * 1024 * 1024))


def _pick_tile_n(N, M_pad, D, block_budget_bytes):
    """Largest 128-multiple node tile that fits the budget, preferring >= 2 grid steps."""
    # f32 double-buffered per-node bytes across both passes:
    #   pass 1: x tile (2*D) + (tile_n, 2) out  ;  pass 2: pnb + scores (+ p1 + cnt)
    bytes_per_node = 4 * (2 * D + 2 * 2 + 2 * (M_pad + 2) + 2 * M_pad)
    t = max(128, block_budget_bytes // max(bytes_per_node, 1))
    t = min(t, 2048)
    t = max(128, (t // 128) * 128)
    t = min(t, _round_up(N, 128))
    # prefer >= 2 grid steps so the "parallel" node axis can split across TensorCores (v7x)
    while t > 128 and _round_up(N, t) // t < 2:
        t = max(128, ((t // 2) // 128) * 128)
    return t


def _project_kernel(x_ref, wT_ref, p_ref):
    """p[:, 0] = x·w1, p[:, 1] = x·w2 for one tile of nodes (MXU; weight resident)."""
    x = x_ref[...].astype(jnp.float32)                       # (tile_n, D)
    p_ref[...] = jnp.dot(x, wT_ref[...], preferred_element_type=jnp.float32)


def _score_kernel(p1_ref, pnb_ref, cnt_ref, b_ref, out_ref):
    """score = exp(leaky_relu(p1 + p2[nbr] + b)); invalid slots -> -inf. Nodes along lanes."""
    z = pnb_ref[...] + p1_ref[...] + b_ref[0]                # (M_pad, tile_n) + (1, tile_n)
    z = jnp.where(z >= 0.0, z, 0.01 * z)                     # leaky_relu (default slope 0.01)
    s = jnp.exp(z)                                           # EUP; monotone -> same top-k order
    slot = jax.lax.broadcasted_iota(jnp.int32, s.shape, 0)   # slot index along sublanes
    out_ref[...] = jnp.where(slot < cnt_ref[...], s, jnp.float32(-jnp.inf))


@jax.jit
def neighbor_scores(node_features, nb_idx_t, counts, fc_w, fc_b):
    """Importance scores (N, M) for every (node, neighbor-slot); invalid slots are -inf.

    nb_idx_t: (M, N) int32 neighbor ids, slot-major (transposed so nodes are the lane axis).
    counts:   (N,)   int32 number of valid neighbor slots per node.
    """
    N, D = node_features.shape
    M = nb_idx_t.shape[0]
    M_pad = _round_up(M, 8)                                  # slots along sublanes (f32 -> 8)

    vmem_limit = _vmem_limit_bytes()
    tile_n = _pick_tile_n(N, M_pad, D, vmem_limit // 3)
    N_pad = _round_up(N, tile_n)

    # fused weight, pre-transposed for the (tile_n, D) @ (D, 2) projection
    wT = jnp.stack([fc_w[0, :D], fc_w[0, D:]], axis=1).astype(jnp.float32)   # (D, 2)
    b = fc_b.reshape(1).astype(jnp.float32)                                  # (1,) SMEM scalar

    # pad only when shapes don't already align (avoids gratuitous HBM copies)
    x = node_features.astype(jnp.float32)
    if N_pad != N:
        x = jnp.pad(x, ((0, N_pad - N), (0, 0)))
    idx = nb_idx_t.astype(jnp.int32)
    if (M_pad != M) or (N_pad != N):
        idx = jnp.pad(idx, ((0, M_pad - M), (0, N_pad - N)))
    cnt = counts.astype(jnp.int32)
    if N_pad != N:
        cnt = jnp.pad(cnt, (0, N_pad - N))
    cnt = cnt.reshape(1, N_pad)

    grid = (N_pad // tile_n,)
    cp = pltpu.CompilerParams(dimension_semantics=("parallel",),
                              vmem_limit_bytes=vmem_limit)

    # ---- pass 1: project every node once against the fused (D, 2) weight ----
    p = pl.pallas_call(
        _project_kernel,
        out_shape=jax.ShapeDtypeStruct((N_pad, 2), jnp.float32),
        grid_spec=pltpu.PrefetchScalarGridSpec(
            num_scalar_prefetch=0,
            grid=grid,
            in_specs=[
                pl.BlockSpec((tile_n, D), lambda i: (i, 0)),   # node features (f32)
                pl.BlockSpec((D, 2), lambda i: (0, 0)),        # fused weight, resident
            ],
            out_specs=pl.BlockSpec((tile_n, 2), lambda i: (i, 0))),
        compiler_params=cp,
    )(x, wT)

    # ---- glue: cheap per-neighbor SCALAR gather in the transposed (M_pad, N_pad) layout ----
    p1_t = p[:, 0].reshape(1, N_pad)                           # center projection, nodes on lanes
    pnb_t = jnp.take(p[:, 1], idx, axis=0)                     # (M_pad, N_pad) gathered neighbor p2

    # ---- pass 2: elementwise scoring over lane-dense (M_pad, tile_n) blocks ----
    scores_t = pl.pallas_call(
        _score_kernel,
        out_shape=jax.ShapeDtypeStruct((M_pad, N_pad), jnp.float32),
        grid_spec=pltpu.PrefetchScalarGridSpec(
            num_scalar_prefetch=0,
            grid=grid,
            in_specs=[
                pl.BlockSpec((1, tile_n), lambda i: (0, i)),           # p1 (center half)
                pl.BlockSpec((M_pad, tile_n), lambda i: (0, i)),       # gathered neighbor p2
                pl.BlockSpec((1, tile_n), lambda i: (0, i)),           # valid-neighbor counts
                pl.BlockSpec(memory_space=pltpu.MemorySpace.SMEM),     # bias scalar
            ],
            out_specs=pl.BlockSpec((M_pad, tile_n), lambda i: (0, i))),
        compiler_params=cp,
    )(p1_t, pnb_t, cnt, b)

    return scores_t[:M, :N].T                                  # (N, M)


def neighbor_selection(node_features, neighbors, node_indices, fc_w, fc_b,
                       neighbor_count=3):
    """Mirrors NeighborSelection.forward semantics on top of the Pallas kernels."""
    N, D = node_features.shape
    M = max(max((len(s) for s in neighbors), default=1), 1)

    nb_lists = [sorted(neighbors[i]) for i in range(N)]
    nb_idx_t = np.zeros((M, N), dtype=np.int32)                # slot-major (nodes on lanes)
    counts = np.zeros((N,), dtype=np.int32)
    for i, lst in enumerate(nb_lists):
        nb_idx_t[:len(lst), i] = np.asarray(lst, dtype=np.int32)
        counts[i] = len(lst)

    scores = neighbor_scores(node_features, jnp.asarray(nb_idx_t),
                             jnp.asarray(counts), fc_w, fc_b)  # (N, M)

    # exp∘leaky_relu is monotone, so top_k over scores == top_k over pre-activations.
    k = min(neighbor_count, M)
    _, top_idx = jax.lax.top_k(scores, k)                      # -inf padded slots never win
    top_idx = np.asarray(jax.block_until_ready(top_idx))

    selected = []
    for node_idx in node_indices:
        lst = nb_lists[node_idx]
        if len(lst) <= neighbor_count:
            selected.append(list(lst))                          # matches original (list branch)
        else:
            selected.append({lst[j] for j in top_idx[node_idx]})  # set branch, like original
    return selected, scores


if __name__ == "__main__":
    N, D = 16, 32          # num_nodes, input_dim
    K = 3                  # neighbor_count

    key = jax.random.PRNGKey(0)
    k_x, k_w, k_b = jax.random.split(key, 3)

    node_features = jax.random.normal(k_x, (N, D), dtype=jnp.float32)
    # fc = nn.Linear(2*D, 1): weight (1, 2D), bias (1,)
    fc_w = jax.random.normal(k_w, (1, 2 * D), dtype=jnp.float32) * 0.1
    fc_b = jax.random.normal(k_b, (1,), dtype=jnp.float32) * 0.1

    # deterministic synthetic neighbor sets (2..8 neighbors per node)
    neighbors = [{(i + j + 1) % N for j in range(2 + (i % 7))} for i in range(N)]
    node_indices = list(range(N))

    selected, scores = neighbor_selection(node_features, neighbors, node_indices,
                                          fc_w, fc_b, neighbor_count=K)
    scores = jax.block_until_ready(scores)

    # ---- numerical check against a full-precision reference of the PyTorch math ----
    xs = np.asarray(node_features, dtype=np.float64)
    wv = np.asarray(fc_w, dtype=np.float64)[0]
    bv = float(np.asarray(fc_b)[0])
    scores_np = np.asarray(scores)
    max_rel = 0.0
    for i in range(N):
        lst = sorted(neighbors[i])
        for j, nb in enumerate(lst):
            z = float(xs[i] @ wv[:D] + xs[nb] @ wv[D:] + bv)
            z = z if z >= 0.0 else 0.01 * z
            ref = np.exp(z)
            got = float(scores_np[i, j])
            max_rel = max(max_rel, abs(got - ref) / max(abs(ref), 1e-6))
    assert max_rel < 2e-3, f"score mismatch, max rel err {max_rel}"

    # ---- selection sanity checks (forward-pass semantics) ----
    assert len(selected) == N
    for i, sel in enumerate(selected):
        if len(neighbors[i]) <= K:
            assert sorted(sel) == sorted(neighbors[i])
        else:
            assert len(sel) == K and set(sel).issubset(neighbors[i])

    print("KERNEL_OK")
</pallas_src>

<mosaic_0001>
module attributes {stable_mosaic.version = 11 : i64} {
  func.func @_project_kernel(%arg0: i32, %arg1: memref<128x32xf32, #tpu.memory_space<vmem>>, %arg2: memref<32x2xf32, #tpu.memory_space<vmem>>, %arg3: memref<128x2xf32, #tpu.memory_space<vmem>>) attributes {dimension_semantics = [#tpu.dimension_semantics<parallel>], iteration_bounds = array<i64: 1>, scalar_prefetch = 0 : i64, scratch_operands = 0 : i64, tpu.core_type = #tpu.core_type<tc>, window_params = [{transform_indices = @transform_0, window_bounds = array<i64: 128, 32>}, {pipeline_mode = #tpu.pipeline_mode<synchronous>, transform_indices = @transform_1, window_bounds = array<i64: 32, 2>}, {transform_indices = @transform_2, window_bounds = array<i64: 128, 2>}]} {
    %c0 = arith.constant 0 : index
    %c0_0 = arith.constant 0 : index
    %0 = vector.load %arg1[%c0, %c0_0] : memref<128x32xf32, #tpu.memory_space<vmem>>, vector<128x32xf32>
    %c0_1 = arith.constant 0 : index
    %c0_2 = arith.constant 0 : index
    %1 = vector.load %arg2[%c0_1, %c0_2] : memref<32x2xf32, #tpu.memory_space<vmem>>, vector<32x2xf32>
    %cst = arith.constant dense<0.000000e+00> : vector<128x2xf32>
    %2 = tpu.matmul %0, %1, %cst {dimension_numbers = #tpu.dot_dimension_numbers<[1], [0], [0], [1], [0, 0, 1, 1], [], []>} : vector<128x32xf32>, vector<32x2xf32>, vector<128x2xf32> -> vector<128x2xf32>
    %c0_3 = arith.constant 0 : index
    %c0_4 = arith.constant 0 : index
    %3 = vector.load %arg3[%c0_3, %c0_4] : memref<128x2xf32, #tpu.memory_space<vmem>>, vector<128x2xf32>
    tpu.vector_store %arg3[%c0_3, %c0_4], %2 {strides = array<i32>} : memref<128x2xf32, #tpu.memory_space<vmem>>, vector<128x2xf32>,
    return
  }
  func.func @transform_0(%arg0: i32) -> (i32, i32) {
    %c0_i32 = arith.constant 0 : i32
    %c0_i32_0 = arith.constant 0 : i32
    return %arg0, %c0_i32 : i32, i32
  }
  func.func @transform_1(%arg0: i32) -> (i32, i32) {
    %c0_i32 = arith.constant 0 : i32
    %c0_i32_0 = arith.constant 0 : i32
    %c0_i32_1 = arith.constant 0 : i32
    return %c0_i32, %c0_i32_0 : i32, i32
  }
  func.func @transform_2(%arg0: i32) -> (i32, i32) {
    %c0_i32 = arith.constant 0 : i32
    %c0_i32_0 = arith.constant 0 : i32
    return %arg0, %c0_i32 : i32, i32
  }
}

module attributes {stable_mosaic.version = 11 : i64} {
  func.func @_score_kernel(%arg0: i32, %arg1: memref<1x128xf32, #tpu.memory_space<vmem>>, %arg2: memref<8x128xf32, #tpu.memory_space<vmem>>, %arg3: memref<1x128xi32, #tpu.memory_space<vmem>>, %arg4: memref<1xf32, #tpu.memory_space<smem>>, %arg5: memref<8x128xf32, #tpu.memory_space<vmem>>) attributes {dimension_semantics = [#tpu.dimension_semantics<parallel>], iteration_bounds = array<i64: 1>, scalar_prefetch = 0 : i64, scratch_operands = 0 : i64, tpu.core_type = #tpu.core_type<tc>, window_params = [{transform_indices = @transform_0, window_bounds = array<i64: 1, 128>}, {transform_indices = @transform_1, window_bounds = array<i64: 8, 128>}, {transform_indices = @transform_2, window_bounds = array<i64: 1, 128>}, {transform_indices = @transform_3, window_bounds = array<i64: 1>}, {transform_indices = @transform_4, window_bounds = array<i64: 8, 128>}]} {
    %c0 = arith.constant 0 : index
    %c0_0 = arith.constant 0 : index
    %0 = vector.load %arg2[%c0, %c0_0] : memref<8x128xf32, #tpu.memory_space<vmem>>, vector<8x128xf32>
    %c0_1 = arith.constant 0 : index
    %c0_2 = arith.constant 0 : index
    %1 = vector.load %arg1[%c0_1, %c0_2] : memref<1x128xf32, #tpu.memory_space<vmem>>, vector<1x128xf32>
    %2 = vector.broadcast %1 : vector<1x128xf32> to vector<8x128xf32>
    %3 = arith.addf %0, %2 : vector<8x128xf32>
    %c0_3 = arith.constant 0 : index
    %4 = memref.load %arg4[%c0_3] : memref<1xf32, #tpu.memory_space<smem>>
    %5 = vector.broadcast %4 : f32 to vector<8x128xf32>
    %6 = arith.addf %3, %5 : vector<8x128xf32>
    %cst = arith.constant 0.000000e+00 : f32
    %7 = vector.broadcast %cst : f32 to vector<8x128xf32>
    %8 = arith.cmpf oge, %6, %7 : vector<8x128xf32>
    %cst_4 = arith.constant 0.00999999977 : f32
    %9 = vector.broadcast %cst_4 : f32 to vector<8x128xf32>
    %10 = arith.mulf %9, %6 : vector<8x128xf32>
    %11 = arith.select %8, %6, %10 : vector<8x128xi1>, vector<8x128xf32>
    %12 = math.exp %11 : vector<8x128xf32>
    %13 = tpu.iota {dimensions = array<i32: 0>} : vector<8x128xi32>
    %c0_5 = arith.constant 0 : index
    %c0_6 = arith.constant 0 : index
    %14 = vector.load %arg3[%c0_5, %c0_6] : memref<1x128xi32, #tpu.memory_space<vmem>>, vector<1x128xi32>
    %15 = vector.broadcast %14 : vector<1x128xi32> to vector<8x128xi32>
    %16 = arith.cmpi slt, %13, %15 : vector<8x128xi32>
    %cst_7 = arith.constant 0xFF800000 : f32
    %17 = vector.broadcast %cst_7 : f32 to vector<8x128xf32>
    %18 = arith.select %16, %12, %17 : vector<8x128xi1>, vector<8x128xf32>
    %c0_8 = arith.constant 0 : index
    %c0_9 = arith.constant 0 : index
    %19 = vector.load %arg5[%c0_8, %c0_9] : memref<8x128xf32, #tpu.memory_space<vmem>>, vector<8x128xf32>
    tpu.vector_store %arg5[%c0_8, %c0_9], %18 {strides = array<i32>} : memref<8x128xf32, #tpu.memory_space<vmem>>, vector<8x128xf32>,
    return
  }
  func.func @transform_0(%arg0: i32) -> (i32, i32) {
    %c0_i32 = arith.constant 0 : i32
    %c0_i32_0 = arith.constant 0 : i32
    return %c0_i32, %arg0 : i32, i32
  }
  func.func @transform_1(%arg0: i32) -> (i32, i32) {
    %c0_i32 = arith.constant 0 : i32
    %c0_i32_0 = arith.constant 0 : i32
    return %c0_i32, %arg0 : i32, i32
  }
  func.func @transform_2(%arg0: i32) -> (i32, i32) {
    %c0_i32 = arith.constant 0 : i32
    %c0_i32_0 = arith.constant 0 : i32
    return %c0_i32, %arg0 : i32, i32
  }
  func.func @transform_3(%arg0: i32) -> i32 {
    %c0_i32 = arith.constant 0 : i32
    %c0_i32_0 = arith.constant 0 : i32
    return %c0_i32 : i32
  }
  func.func @transform_4(%arg0: i32) -> (i32, i32) {
    %c0_i32 = arith.constant 0 : i32
    %c0_i32_0 = arith.constant 0 : i32
    return %c0_i32, %arg0 : i32, i32
  }
}

</mosaic_0001>

<llo_original>
// kernel: neighbor_scores.3
$region0: #{neighbor_scores.3}
  #allocation0 [shape = 'u32[]', space=smem, size = 0x4, offset = 0x4, fixed_abs, tag = 'smem constant byte address 0x4 - core index']
  #allocation1 [shape = 'u32[144,128]{1,0:T(1,128)}', space=vmem, size = 0x12000, scoped, tag = 'internal scratch']
  #allocation2 [shape = 'f32[1]{0:T(128)S(6)}', space=smem, size = 0x200, scoped, tag = 'scoped memory for neighbor_scores.3']
  %s0 = inlined_call_operand.vmem [shape: f32[1,128], index: 0, kind: input, shape index: {}]
  %s1 = inlined_call_operand.vmem [shape: f32[8,128], index: 1, kind: input, shape index: {}]
  %s2 = inlined_call_operand.vmem [shape: s32[1,128], index: 2, kind: input, shape index: {}]
  %s3 = inlined_call_operand.<no memory space> [shape: f32[1], index: 3, kind: input, shape index: {}]
  %s4 = inlined_call_operand.vmem [shape: f32[8,128], index: 4, kind: output, shape index: {}]
  %s5 = sld [smem:[#allocation0]]
  $region26: #{neighbor_scores.3} parent=0
    _
  %s7 = ssub.s32 1, %s5
  %s8 = scalar_select 0, %s7, %s5
  %9 = sst [smem:[#allocation2]] %s3
  // Predicated region
  $region2: #{neighbor_scores.3} parent=0 // pred_check
    _
  $region3: #{neighbor_scores.3} parent=0 // pred_check_branch
    %11 = sbr.rel (0) target = $region5
  $region4: #{neighbor_scores.3} parent=0 // pred_region
    _
  $region5: #{neighbor_scores.3} parent=0 // pred_fallthru
    _
  // Predicated region
  $region6: #{neighbor_scores.3} parent=0 // pred_check
    _
  $region7: #{neighbor_scores.3} parent=0 // pred_check_branch
    %13 = sbr.rel (0) target = $region9
  $region8: #{neighbor_scores.3} parent=0 // pred_region
    _
  $region9: #{neighbor_scores.3} parent=0 // pred_fallthru
    _
  // Predicated region
  $region10: #{neighbor_scores.3} parent=0 // pred_check
    _
  $region11: #{neighbor_scores.3} parent=0 // pred_check_branch
    %15 = sbr.rel (0) target = $region13
  $region12: #{neighbor_scores.3} parent=0 // pred_region
    _
  $region13: #{neighbor_scores.3} parent=0 // pred_fallthru
    _
  // Predicated region
  $region14: #{neighbor_scores.3} parent=0 // pred_check
    _
  $region15: #{neighbor_scores.3} parent=0 // pred_check_branch
    %17 = sbr.rel (0) target = $region17
  $region16: #{neighbor_scores.3} parent=0 // pred_region
    _
  $region17: #{neighbor_scores.3} parent=0 // pred_fallthru
    _
  %v18 = vld [vmem:[%s1] sm:$0xff]
  %v19 = vld [vmem:[%s0] sm:$0x1]
  %v21 = vlaneseq
  %v22 = vshrl.u32 %v21, 7
  %v23 = vsub.s32 0, %v22
  %v24 = vrot.slane %v19, %v23
  %v26 = vadd.f32 %v18, %v24
  %s27 = sld [smem:[#allocation2]]
  %v28 = vstv %s27
  %v29 = vadd.f32 %v26, %v28
  %vm30 = vcmp.ge.f32.partialorder %v29, 0.0
  %v31 = vmul.f32 %v29, 0.01
  %v32 = vsel %vm30, %v29, %v31
  %v33 = vmul.f32 %v32, 1.442695
  %v34 = vpow.pop %v33
  %v35 = vlaneseq
  %v36 = vshrl.u32 %v35, 7
  %v37 = vld [vmem:[%s2] sm:$0x1]
  %v38 = vlaneseq
  %v39 = vshrl.u32 %v38, 7
  %v40 = vsub.s32 0, %v39
  %v41 = vrot.slane %v37, %v40
  %vm42 = vcmp.lt.s32.totalorder %v36, %v41
  %v43 = vsel %vm42, %v34, -inf
  %44 = vst [vmem:[%s4] sm:$0xff] %v43
  // Predicated region
  $region18: #{neighbor_scores.3} parent=0 // pred_check
    _
  $region19: #{neighbor_scores.3} parent=0 // pred_check_branch
    %46 = sbr.rel (0) target = $region21
  $region20: #{neighbor_scores.3} parent=0 // pred_region
    _
  $region21: #{neighbor_scores.3} parent=0 // pred_fallthru
    _
  // Predicated region
  $region22: #{neighbor_scores.3} parent=0 // pred_check
    _
  $region23: #{neighbor_scores.3} parent=0 // pred_check_branch
    %48 = sbr.rel (0) target = $region25
  $region24: #{neighbor_scores.3} parent=0 // pred_region
    _
  $region25: #{neighbor_scores.3} parent=0 // pred_fallthru
    _

// kernel: neighbor_scores.2
$region0: #{neighbor_scores.2}
  #allocation0 [shape = 'u32[]', space=smem, size = 0x4, offset = 0x4, fixed_abs, tag = 'smem constant byte address 0x4 - core index']
  #allocation1 [shape = 'u32[144,128]{1,0:T(1,128)}', space=vmem, size = 0x12000, scoped, tag = 'internal scratch']
  %s0 = inlined_call_operand.vmem [shape: f32[128,32], index: 0, kind: input, shape index: {}]
  %s1 = inlined_call_operand.vmem [shape: f32[32,2], index: 1, kind: input, shape index: {}]
  %s2 = inlined_call_operand.vmem [shape: f32[128,2], index: 2, kind: output, shape index: {}]
  %s3 = sld [smem:[#allocation0]]
  $region18: #{neighbor_scores.2} parent=0
    _
  %s5 = ssub.s32 1, %s3
  %s6 = scalar_select 0, %s5, %s3
  // Predicated region
  $region2: #{neighbor_scores.2} parent=0 // pred_check
    _
  $region3: #{neighbor_scores.2} parent=0 // pred_check_branch
    %8 = sbr.rel (0) target = $region5
  $region4: #{neighbor_scores.2} parent=0 // pred_region
    _
  $region5: #{neighbor_scores.2} parent=0 // pred_fallthru
    _
  // Predicated region
  $region6: #{neighbor_scores.2} parent=0 // pred_check
    _
  $region7: #{neighbor_scores.2} parent=0 // pred_check_branch
    %10 = sbr.rel (0) target = $region9
  $region8: #{neighbor_scores.2} parent=0 // pred_region
    _
  $region9: #{neighbor_scores.2} parent=0 // pred_fallthru
    _
  %v11 = vld [vmem:[%s0] sm:$0xff]
  %v12 = vld [vmem:[%s0 + $0x8] sm:$0xff]
  %v13 = vld [vmem:[%s0 + $0x10] sm:$0xff]
  %v14 = vld [vmem:[%s0 + $0x18] sm:$0xff]
  %v15 = vld [vmem:[%s0 + $0x20] sm:$0xff]
  %v16 = vld [vmem:[%s0 + $0x28] sm:$0xff]
  %v17 = vld [vmem:[%s0 + $0x30] sm:$0xff]
  %v18 = vld [vmem:[%s0 + $0x38] sm:$0xff]
  %v19 = vld [vmem:[%s0 + $0x40] sm:$0xff]
  %v20 = vld [vmem:[%s0 + $0x48] sm:$0xff]
  %v21 = vld [vmem:[%s0 + $0x50] sm:$0xff]
  %v22 = vld [vmem:[%s0 + $0x58] sm:$0xff]
  %v23 = vld [vmem:[%s0 + $0x60] sm:$0xff]
  %v24 = vld [vmem:[%s0 + $0x68] sm:$0xff]
  %v25 = vld [vmem:[%s0 + $0x70] sm:$0xff]
  %v26 = vld [vmem:[%s0 + $0x78] sm:$0xff]
  %v27 = vld [vmem:[%s1] sm:$0xff]
  %v28 = vld [vmem:[%s1 + $0x8] sm:$0xff]
  %v29 = vld [vmem:[%s1 + $0x10] sm:$0xff]
  %v30 = vld [vmem:[%s1 + $0x18] sm:$0xff]
  %vm31 = vcmask 261120
  %v33 = vsel %vm31, %v11, 0
  %v36 = vsel %vm31, %v12, 0
  %v39 = vsel %vm31, %v13, 0
  %v42 = vsel %vm31, %v14, 0
  %v45 = vsel %vm31, %v15, 0
  %v48 = vsel %vm31, %v16, 0
  %v51 = vsel %vm31, %v17, 0
  %v54 = vsel %vm31, %v18, 0
  %v57 = vsel %vm31, %v19, 0
  %v60 = vsel %vm31, %v20, 0
  %v63 = vsel %vm31, %v21, 0
  %v66 = vsel %vm31, %v22, 0
  %v69 = vsel %vm31, %v23, 0
  %v72 = vsel %vm31, %v24, 0
  %v75 = vsel %vm31, %v25, 0
  %v78 = vsel %vm31, %v26, 0
  %80 = vmatprep.subr.mxu0 0.0
  %81 = vmatpush1.msra.mxu0 0.0
  %82 = vmatprep.subr.mxu0 0.0
  %83 = vmatpush1.msra.mxu0 0.0
  %84 = vmatprep.subr.mxu0 0.0
  %85 = vmatpush1.msra.mxu0 0.0
  %86 = vmatprep.subr.mxu0 0.0
  %87 = vmatpush1.msra.mxu0 0.0
  %88 = vmatprep.subr.mxu0 0.0
  %89 = vmatpush1.msra.mxu0 0.0
  %90 = vmatprep.subr.mxu0 0.0
  %91 = vmatpush1.msra.mxu0 0.0
  %92 = vmatprep.subr.mxu0 0.0
  %93 = vmatpush1.msra.mxu0 0.0
  %94 = vmatprep.subr.mxu0 0.0
  %95 = vmatpush1.msra.mxu0 0.0
  %96 = vmatprep.subr.mxu0 0.0
  %97 = vmatpush1.msra.mxu0 0.0
  %98 = vmatprep.subr.mxu0 0.0
  %99 = vmatpush1.msra.mxu0 0.0
  %100 = vmatprep.subr.mxu0 0.0
  %101 = vmatpush1.msra.mxu0 0.0
  %102 = vmatprep.subr.mxu0 0.0
  %103 = vmatpush1.msra.mxu0 0.0
  %104 = vmatprep.subr.mxu0 0.0
  %105 = vmatpush1.msra.mxu0 %v30
  %106 = vmatprep.subr.mxu0 0.0
  %107 = vmatpush1.msra.mxu0 %v29
  %108 = vmatprep.subr.mxu0 0.0
  %109 = vmatpush1.msra.mxu0 %v28
  %110 = vmatprep.subr.mxu0 0.0
  %111 = vmatpush1.msra.mxu0 %v27
  %112 = vmatprep.subr.mxu0 0.0
  %113 = vmatpush2.msra.mxu0 0.0
  %114 = vmatprep.subr.mxu0 0.0
  %115 = vmatpush2.msra.mxu0 0.0
  %116 = vmatprep.subr.mxu0 0.0
  %117 = vmatpush2.msra.mxu0 0.0
  %118 = vmatprep.subr.mxu0 0.0
  %119 = vmatpush2.msra.mxu0 0.0
  %120 = vmatprep.subr.mxu0 0.0
  %121 = vmatpush2.msra.mxu0 0.0
  %122 = vmatprep.subr.mxu0 0.0
  %123 = vmatpush2.msra.mxu0 0.0
  %124 = vmatprep.subr.mxu0 0.0
  %125 = vmatpush2.msra.mxu0 0.0
  %126 = vmatprep.subr.mxu0 0.0
  %127 = vmatpush2.msra.mxu0 0.0
  %128 = vmatprep.subr.mxu0 0.0
  %129 = vmatpush2.msra.mxu0 0.0
  %130 = vmatprep.subr.mxu0 0.0
  %131 = vmatpush2.msra.mxu0 0.0
  %132 = vmatprep.subr.mxu0 0.0
  %133 = vmatpush2.msra.mxu0 0.0
  %134 = vmatprep.subr.mxu0 0.0
  %135 = vmatpush2.msra.mxu0 0.0
  %136 = vmatprep.subr.mxu0 0.0
  %137 = vmatpush2.msra.mxu0 0.0
  %138 = vmatprep.subr.mxu0 0.0
  %139 = vmatpush2.msra.mxu0 0.0
  %140 = vmatprep.subr.mxu0 0.0
  %141 = vmatpush2.msra.mxu0 0.0
  %142 = vmatprep.subr.mxu0 0.0
  %143 = vmatpush2.msra.mxu0 0.0
  %144 = vmatprep.mubr.f32.mxu0 0.0
  %145 = vmatmul.mubr.f32.gmra.mxu0 %v33
  %v146 = vpop.f32.mrf.mxu0
  %v147 = vadd.f32 0.0, %v146
  %v148 = vpop.f32.mrf.mxu0
  %149 = vmatprep.mubr.f32.mxu0 0.0
  %150 = vmatmul.mubr.f32.gmra.mxu0 %v36
  %v151 = vpop.f32.mrf.mxu0
  %v152 = vadd.f32 0.0, %v151
  %v153 = vpop.f32.mrf.mxu0
  %154 = vmatprep.mubr.f32.mxu0 0.0
  %155 = vmatmul.mubr.f32.gmra.mxu0 %v39
  %v156 = vpop.f32.mrf.mxu0
  %v157 = vadd.f32 0.0, %v156
  %v158 = vpop.f32.mrf.mxu0
  %159 = vmatprep.mubr.f32.mxu0 0.0
  %160 = vmatmul.mubr.f32.gmra.mxu0 %v42
  %v161 = vpop.f32.mrf.mxu0
  %v162 = vadd.f32 0.0, %v161
  %v163 = vpop.f32.mrf.mxu0
  %164 = vmatprep.mubr.f32.mxu0 0.0
  %165 = vmatmul.mubr.f32.gmra.mxu0 %v45
  %v166 = vpop.f32.mrf.mxu0
  %v167 = vadd.f32 0.0, %v166
  %v168 = vpop.f32.mrf.mxu0
  %169 = vmatprep.mubr.f32.mxu0 0.0
  %170 = vmatmul.mubr.f32.gmra.mxu0 %v48
  %v171 = vpop.f32.mrf.mxu0
  %v172 = vadd.f32 0.0, %v171
  %v173 = vpop.f32.mrf.mxu0
  %174 = vmatprep.mubr.f32.mxu0 0.0
  %175 = vmatmul.mubr.f32.gmra.mxu0 %v51
  %v176 = vpop.f32.mrf.mxu0
  %v177 = vadd.f32 0.0, %v176
  %v178 = vpop.f32.mrf.mxu0
  %179 = vmatprep.mubr.f32.mxu0 0.0
  %180 = vmatmul.mubr.f32.gmra.mxu0 %v54
  %v181 = vpop.f32.mrf.mxu0
  %v182 = vadd.f32 0.0, %v181
  %v183 = vpop.f32.mrf.mxu0
  %184 = vmatprep.mubr.f32.mxu0 0.0
  %185 = vmatmul.mubr.f32.gmra.mxu0 %v57
  %v186 = vpop.f32.mrf.mxu0
  %v187 = vadd.f32 0.0, %v186
  %v188 = vpop.f32.mrf.mxu0
  %189 = vmatprep.mubr.f32.mxu0 0.0
  %190 = vmatmul.mubr.f32.gmra.mxu0 %v60
  %v191 = vpop.f32.mrf.mxu0
  %v192 = vadd.f32 0.0, %v191
  %v193 = vpop.f32.mrf.mxu0
  %194 = vmatprep.mubr.f32.mxu0 0.0
  %195 = vmatmul.mubr.f32.gmra.mxu0 %v63
  %v196 = vpop.f32.mrf.mxu0
  %v197 = vadd.f32 0.0, %v196
  %v198 = vpop.f32.mrf.mxu0
  %199 = vmatprep.mubr.f32.mxu0 0.0
  %200 = vmatmul.mubr.f32.gmra.mxu0 %v66
  %v201 = vpop.f32.mrf.mxu0
  %v202 = vadd.f32 0.0, %v201
  %v203 = vpop.f32.mrf.mxu0
  %204 = vmatprep.mubr.f32.mxu0 0.0
  %205 = vmatmul.mubr.f32.gmra.mxu0 %v69
  %v206 = vpop.f32.mrf.mxu0
  %v207 = vadd.f32 0.0, %v206
  %v208 = vpop.f32.mrf.mxu0
  %209 = vmatprep.mubr.f32.mxu0 0.0
  %210 = vmatmul.mubr.f32.gmra.mxu0 %v72
  %v211 = vpop.f32.mrf.mxu0
  %v212 = vadd.f32 0.0, %v211
  %v213 = vpop.f32.mrf.mxu0
  %214 = vmatprep.mubr.f32.mxu0 0.0
  %215 = vmatmul.mubr.f32.gmra.mxu0 %v75
  %v216 = vpop.f32.mrf.mxu0
  %v217 = vadd.f32 0.0, %v216
  %v218 = vpop.f32.mrf.mxu0
  %219 = vmatprep.mubr.f32.mxu0 0.0
  %220 = vmatmul.mubr.f32.gmra.mxu0 %v78
  %v221 = vpop.f32.mrf.mxu0
  %v222 = vadd.f32 0.0, %v221
  %v223 = vpop.f32.mrf.mxu0
  %224 = vdwg.mxu0
  %vm225 = vcmask 15360
  %226 = vst.msk [vmem:[%s2] sm:$0xff] %vm225, %v147
  %227 = vst.msk [vmem:[%s2 + $0x8] sm:$0xff] %vm225, %v152
  %228 = vst.msk [vmem:[%s2 + $0x10] sm:$0xff] %vm225, %v157
  %229 = vst.msk [vmem:[%s2 + $0x18] sm:$0xff] %vm225, %v162
  %230 = vst.msk [vmem:[%s2 + $0x20] sm:$0xff] %vm225, %v167
  %231 = vst.msk [vmem:[%s2 + $0x28] sm:$0xff] %vm225, %v172
  %232 = vst.msk [vmem:[%s2 + $0x30] sm:$0xff] %vm225, %v177
  %233 = vst.msk [vmem:[%s2 + $0x38] sm:$0xff] %vm225, %v182
  %234 = vst.msk [vmem:[%s2 + $0x40] sm:$0xff] %vm225, %v187
  %235 = vst.msk [vmem:[%s2 + $0x48] sm:$0xff] %vm225, %v192
  %236 = vst.msk [vmem:[%s2 + $0x50] sm:$0xff] %vm225, %v197
  %237 = vst.msk [vmem:[%s2 + $0x58] sm:$0xff] %vm225, %v202
  %238 = vst.msk [vmem:[%s2 + $0x60] sm:$0xff] %vm225, %v207
  %239 = vst.msk [vmem:[%s2 + $0x68] sm:$0xff] %vm225, %v212
  %240 = vst.msk [vmem:[%s2 + $0x70] sm:$0xff] %vm225, %v217
  %241 = vst.msk [vmem:[%s2 + $0x78] sm:$0xff] %vm225, %v222
  // Predicated region
  $region10: #{neighbor_scores.2} parent=0 // pred_check
    _
  $region11: #{neighbor_scores.2} parent=0 // pred_check_branch
    %243 = sbr.rel (0) target = $region13
  $region12: #{neighbor_scores.2} parent=0 // pred_region
    _
  $region13: #{neighbor_scores.2} parent=0 // pred_fallthru
    _
  // Predicated region
  $region14: #{neighbor_scores.2} parent=0 // pred_check
    _
  $region15: #{neighbor_scores.2} parent=0 // pred_check_branch
    %245 = sbr.rel (0) target = $region17
  $region16: #{neighbor_scores.2} parent=0 // pred_region
    _
  $region17: #{neighbor_scores.2} parent=0 // pred_fallthru
    _

</llo_original>
